<compile_context>
chip_gen: v5e
topology: v5e:2x2
jax: 0.10.0
libtpu: 0.0.40
codegen_flags: <defaults>
</compile_context>

<pallas_src>
import math

import jax
import jax.numpy as jnp
from jax.experimental import pallas as pl
from jax.experimental.pallas import tpu as pltpu


# ---------------------------------------------------------------------------
# Kernel
# ---------------------------------------------------------------------------
def _time_embedding_kernel(tt_ref, wper_ref, bper_ref, wprest_ref,
                           wp0_eff_ref, bproj_eff_ref, out_ref):
    # tt_ref:        [T, 1]     time stamps for this row tile (f32)
    # wper_ref:      [1, E-1]   periodic weight (transposed)
    # bper_ref:      [1, E-1]   periodic bias
    # wprest_ref:    [E-1, P]   rows 1.. of W_proj^T   (f32 or bf16)
    # wp0_eff_ref:   [1, P]     w_lin * W_proj^T[0]           (folded t1 weight)
    # bproj_eff_ref: [1, P]     b_lin * W_proj^T[0] + b_proj  (folded t1 bias)
    # out_ref:       [T, P]     (f32 or bf16)
    tt = tt_ref[...]                                            # [T, 1] f32

    # t2 = sin(periodic(tt)) — a Linear with in_features=1 is a broadcast FMA.
    t2 = jnp.sin(tt * wper_ref[...] + bper_ref[...])            # [T, E-1] f32

    # Projection of the periodic part on the MXU (f32 accumulation).
    acc = jnp.dot(t2.astype(wprest_ref.dtype), wprest_ref[...],
                  preferred_element_type=jnp.float32)           # [T, P] f32

    # Folded Linear(1,1) contribution + projection bias, then ReLU.
    acc = acc + tt * wp0_eff_ref[...] + bproj_eff_ref[...]
    out_ref[...] = jnp.maximum(acc, 0.0).astype(out_ref.dtype)


# ---------------------------------------------------------------------------
# Parameter folding (call ONCE per parameter set — hoisted out of forward)
# ---------------------------------------------------------------------------
def fold_time_embedding_params(params, *, weight_dtype=jnp.float32):
    """Fold Linear(1,1) into the projection; return kernel-ready slabs.

    Algebraic identity:
      concat([t1, t2]) @ Wp^T + bp
        = tt * (w_lin * Wp^T[0]) + t2 @ Wp^T[1:] + (b_lin * Wp^T[0] + bp)
    """
    E1 = params["w_per"].shape[0]            # embed_dim - 1
    P = params["w_proj"].shape[0]            # proj_dim
    assert E1 >= 1, "embed_dim must be >= 2 (periodic part would be empty)"

    wper = params["w_per"].reshape(1, E1).astype(jnp.float32)
    bper = params["b_per"].reshape(1, E1).astype(jnp.float32)

    wp_t = params["w_proj"].T.astype(jnp.float32)               # [E, P]
    wprest = wp_t[1:, :].astype(weight_dtype)                   # [E-1, P]

    w_lin = params["w_lin"].reshape(()).astype(jnp.float32)
    b_lin = params["b_lin"].reshape(()).astype(jnp.float32)
    wp0 = wp_t[0:1, :]                                          # [1, P]
    wp0_eff = (w_lin * wp0).astype(jnp.float32)                 # folded t1 weight
    bproj_eff = (b_lin * wp0
                 + params["b_proj"].reshape(1, P).astype(jnp.float32))

    return dict(wper=wper, bper=bper, wprest=wprest,
                wp0_eff=wp0_eff, bproj_eff=bproj_eff)


# ---------------------------------------------------------------------------
# Forward
# ---------------------------------------------------------------------------
def time_embedding_forward(tt, folded, *, out_dtype=jnp.float32,
                           target_tile_n=4096):
    """tt: [B, S, 1] float32 -> [B, S, proj_dim] (out_dtype)."""
    B, S, one = tt.shape
    assert one == 1
    N = B * S

    E1 = folded["wper"].shape[1]             # embed_dim - 1
    P = folded["wprest"].shape[1]            # proj_dim
    w_itemsize = jnp.dtype(folded["wprest"].dtype).itemsize
    o_itemsize = jnp.dtype(out_dtype).itemsize

    # ---- row tiling over N (no padding, no post-kernel slice) -------------
    # Cap tile rows so a single double-buffered output tile stays modest.
    rows_cap = max(8, ((8 << 20) // max(P * o_itemsize, 1)) // 8 * 8)
    tile_n = min(target_tile_n, rows_cap, N)
    if tile_n < N:
        tile_n = max(8, (tile_n // 8) * 8)   # f32 sublane multiple when tiled
    grid = (pl.cdiv(N, tile_n),)             # partial edge tile handled by Pallas

    tt_flat = tt.reshape(N, 1).astype(jnp.float32)   # free reshape, no copy

    # ---- honest VMEM budget (everything double-buffered by default) -------
    weight_bytes = 2 * (2 * E1 * 4 + E1 * P * w_itemsize + 2 * P * 4)
    io_bytes = 2 * (tile_n * 4 + tile_n * P * o_itemsize)
    temp_bytes = tile_n * E1 * 4 + tile_n * P * 4          # t2 + f32 acc
    vmem_est = weight_bytes + io_bytes + temp_bytes + (8 << 20)
    try:
        cap = getattr(pltpu.get_tpu_info(), "vmem_capacity_bytes", None)
        cap = int(cap * 3 // 4) if cap else (48 << 20)      # ~48 MiB v7x, ~96 MiB v5e/v6e
    except Exception:
        cap = 48 << 20
    vmem_limit = int(min(max(vmem_est, 32 << 20), cap))

    const2d = lambda i: (0, 0)
    out = pl.pallas_call(
        _time_embedding_kernel,
        out_shape=jax.ShapeDtypeStruct((N, P), out_dtype),
        grid=grid,
        in_specs=[
            pl.BlockSpec((tile_n, 1), lambda i: (i, 0)),      # tt rows
            pl.BlockSpec((1, E1), const2d),                   # periodic weight
            pl.BlockSpec((1, E1), const2d),                   # periodic bias
            pl.BlockSpec((E1, P), const2d),                   # proj weight rows 1..
            pl.BlockSpec((1, P), const2d),                    # folded t1 weight
            pl.BlockSpec((1, P), const2d),                    # folded t1/proj bias
        ],
        out_specs=pl.BlockSpec((tile_n, P), lambda i: (i, 0)),
        compiler_params=pltpu.CompilerParams(
            dimension_semantics=("parallel",),
            vmem_limit_bytes=vmem_limit),
    )(tt_flat, folded["wper"], folded["bper"], folded["wprest"],
      folded["wp0_eff"], folded["bproj_eff"])

    return out.reshape(B, S, P)


# ---------------------------------------------------------------------------
# Init / reference (PyTorch-equivalent)
# ---------------------------------------------------------------------------
def init_time_embedding_params(key, embed_dim, proj_dim):
    """Deterministic init mirroring nn.Linear default U(-1/sqrt(fan_in), ..)."""
    k1, k2, k3, k4, k5, k6 = jax.random.split(key, 6)

    bound = 1.0 / math.sqrt(1.0)
    w_lin = jax.random.uniform(k1, (1, 1), jnp.float32, -bound, bound)
    b_lin = jax.random.uniform(k2, (1,), jnp.float32, -bound, bound)

    w_per = jax.random.uniform(k3, (embed_dim - 1, 1), jnp.float32, -bound, bound)
    b_per = jax.random.uniform(k4, (embed_dim - 1,), jnp.float32, -bound, bound)

    bound_p = 1.0 / math.sqrt(embed_dim)
    w_proj = jax.random.uniform(k5, (proj_dim, embed_dim), jnp.float32,
                                -bound_p, bound_p)
    b_proj = jax.random.uniform(k6, (proj_dim,), jnp.float32, -bound_p, bound_p)

    return dict(w_lin=w_lin, b_lin=b_lin, w_per=w_per, b_per=b_per,
                w_proj=w_proj, b_proj=b_proj)


def _reference_forward(tt, params):
    """Pure-JAX reference matching the PyTorch forward exactly."""
    t1 = tt @ params["w_lin"].T + params["b_lin"]
    t2 = jnp.sin(tt @ params["w_per"].T + params["b_per"])
    t = jnp.concatenate([t1, t2], axis=-1)
    t = t @ params["w_proj"].T + params["b_proj"]
    return jnp.maximum(t, 0.0)


if __name__ == "__main__":
    # final_dim is unused in the module's forward pass; omitted here.
    embed_dim, proj_dim = 32, 64
    B, S = 2, 8

    key = jax.random.PRNGKey(0)
    pkey, xkey = jax.random.split(key)
    params = init_time_embedding_params(pkey, embed_dim, proj_dim)

    # time stamps, shape [B, S, 1]
    tt = jax.random.uniform(xkey, (B, S, 1), jnp.float32, 0.0, 10.0)

    ref = _reference_forward(tt, params)

    # --- f32 path (default; matches PyTorch semantics) ---------------------
    folded_f32 = fold_time_embedding_params(params)          # hoisted: once per params
    out = jax.block_until_ready(time_embedding_forward(tt, folded_f32))
    assert out.shape == (B, S, proj_dim)
    assert jnp.allclose(out, ref, atol=1e-5, rtol=1e-5), "f32 mismatch vs reference"

    # --- bf16 fast path (halved weight + writeback bytes; mem-bound win) ---
    folded_bf16 = fold_time_embedding_params(params, weight_dtype=jnp.bfloat16)
    out_bf16 = jax.block_until_ready(
        time_embedding_forward(tt, folded_bf16, out_dtype=jnp.bfloat16))
    assert out_bf16.shape == (B, S, proj_dim)
    assert jnp.allclose(out_bf16.astype(jnp.float32), ref, atol=5e-2, rtol=5e-2), \
        "bf16 mismatch vs reference"

    print("KERNEL_OK")
</pallas_src>

<mosaic_0001>
module attributes {stable_mosaic.version = 11 : i64} {
  func.func @_time_embedding_kernel(%arg0: i32, %arg1: memref<16x1xf32, #tpu.memory_space<vmem>>, %arg2: memref<1x31xf32, #tpu.memory_space<vmem>>, %arg3: memref<1x31xf32, #tpu.memory_space<vmem>>, %arg4: memref<31x64xf32, #tpu.memory_space<vmem>>, %arg5: memref<1x64xf32, #tpu.memory_space<vmem>>, %arg6: memref<1x64xf32, #tpu.memory_space<vmem>>, %arg7: memref<16x64xf32, #tpu.memory_space<vmem>>) attributes {dimension_semantics = [#tpu.dimension_semantics<parallel>], iteration_bounds = array<i64: 1>, scalar_prefetch = 0 : i64, scratch_operands = 0 : i64, tpu.core_type = #tpu.core_type<tc>, window_params = [{transform_indices = @transform_0, window_bounds = array<i64: 16, 1>}, {pipeline_mode = #tpu.pipeline_mode<synchronous>, transform_indices = @transform_1, window_bounds = array<i64: 1, 31>}, {pipeline_mode = #tpu.pipeline_mode<synchronous>, transform_indices = @transform_2, window_bounds = array<i64: 1, 31>}, {pipeline_mode = #tpu.pipeline_mode<synchronous>, transform_indices = @transform_3, window_bounds = array<i64: 31, 64>}, {pipeline_mode = #tpu.pipeline_mode<synchronous>, transform_indices = @transform_4, window_bounds = array<i64: 1, 64>}, {pipeline_mode = #tpu.pipeline_mode<synchronous>, transform_indices = @transform_5, window_bounds = array<i64: 1, 64>}, {transform_indices = @transform_6, window_bounds = array<i64: 16, 64>}]} {
    %c0 = arith.constant 0 : index
    %c0_0 = arith.constant 0 : index
    %0 = vector.load %arg1[%c0, %c0_0] : memref<16x1xf32, #tpu.memory_space<vmem>>, vector<16x1xf32>
    %c0_1 = arith.constant 0 : index
    %c0_2 = arith.constant 0 : index
    %1 = vector.load %arg2[%c0_1, %c0_2] : memref<1x31xf32, #tpu.memory_space<vmem>>, vector<1x31xf32>
    %2 = vector.broadcast %0 : vector<16x1xf32> to vector<16x31xf32>
    %3 = vector.broadcast %1 : vector<1x31xf32> to vector<16x31xf32>
    %4 = arith.mulf %2, %3 : vector<16x31xf32>
    %c0_3 = arith.constant 0 : index
    %c0_4 = arith.constant 0 : index
    %5 = vector.load %arg3[%c0_3, %c0_4] : memref<1x31xf32, #tpu.memory_space<vmem>>, vector<1x31xf32>
    %6 = vector.broadcast %5 : vector<1x31xf32> to vector<16x31xf32>
    %7 = arith.addf %4, %6 : vector<16x31xf32>
    %8 = math.sin %7 : vector<16x31xf32>
    %c0_5 = arith.constant 0 : index
    %c0_6 = arith.constant 0 : index
    %9 = vector.load %arg4[%c0_5, %c0_6] : memref<31x64xf32, #tpu.memory_space<vmem>>, vector<31x64xf32>
    %cst = arith.constant dense<0.000000e+00> : vector<16x64xf32>
    %10 = tpu.matmul %8, %9, %cst {dimension_numbers = #tpu.dot_dimension_numbers<[1], [0], [0], [1], [0, 0, 1, 1], [], []>} : vector<16x31xf32>, vector<31x64xf32>, vector<16x64xf32> -> vector<16x64xf32>
    %c0_7 = arith.constant 0 : index
    %c0_8 = arith.constant 0 : index
    %11 = vector.load %arg5[%c0_7, %c0_8] : memref<1x64xf32, #tpu.memory_space<vmem>>, vector<1x64xf32>
    %12 = vector.broadcast %0 : vector<16x1xf32> to vector<16x64xf32>
    %13 = vector.broadcast %11 : vector<1x64xf32> to vector<16x64xf32>
    %14 = arith.mulf %12, %13 : vector<16x64xf32>
    %15 = arith.addf %10, %14 : vector<16x64xf32>
    %c0_9 = arith.constant 0 : index
    %c0_10 = arith.constant 0 : index
    %16 = vector.load %arg6[%c0_9, %c0_10] : memref<1x64xf32, #tpu.memory_space<vmem>>, vector<1x64xf32>
    %17 = vector.broadcast %16 : vector<1x64xf32> to vector<16x64xf32>
    %18 = arith.addf %15, %17 : vector<16x64xf32>
    %cst_11 = arith.constant 0.000000e+00 : f32
    %19 = vector.broadcast %cst_11 : f32 to vector<16x64xf32>
    %20 = arith.maximumf %18, %19 : vector<16x64xf32>
    %c0_12 = arith.constant 0 : index
    %c0_13 = arith.constant 0 : index
    %21 = vector.load %arg7[%c0_12, %c0_13] : memref<16x64xf32, #tpu.memory_space<vmem>>, vector<16x64xf32>
    tpu.vector_store %arg7[%c0_12, %c0_13], %20 {strides = array<i32>} : memref<16x64xf32, #tpu.memory_space<vmem>>, vector<16x64xf32>,
    return
  }
  func.func @transform_0(%arg0: i32) -> (i32, i32) {
    %c0_i32 = arith.constant 0 : i32
    %c0_i32_0 = arith.constant 0 : i32
    return %arg0, %c0_i32 : i32, i32
  }
  func.func @transform_1(%arg0: i32) -> (i32, i32) {
    %c0_i32 = arith.constant 0 : i32
    %c0_i32_0 = arith.constant 0 : i32
    %c0_i32_1 = arith.constant 0 : i32
    return %c0_i32, %c0_i32_0 : i32, i32
  }
  func.func @transform_2(%arg0: i32) -> (i32, i32) {
    %c0_i32 = arith.constant 0 : i32
    %c0_i32_0 = arith.constant 0 : i32
    %c0_i32_1 = arith.constant 0 : i32
    return %c0_i32, %c0_i32_0 : i32, i32
  }
  func.func @transform_3(%arg0: i32) -> (i32, i32) {
    %c0_i32 = arith.constant 0 : i32
    %c0_i32_0 = arith.constant 0 : i32
    %c0_i32_1 = arith.constant 0 : i32
    return %c0_i32, %c0_i32_0 : i32, i32
  }
  func.func @transform_4(%arg0: i32) -> (i32, i32) {
    %c0_i32 = arith.constant 0 : i32
    %c0_i32_0 = arith.constant 0 : i32
    %c0_i32_1 = arith.constant 0 : i32
    return %c0_i32, %c0_i32_0 : i32, i32
  }
  func.func @transform_5(%arg0: i32) -> (i32, i32) {
    %c0_i32 = arith.constant 0 : i32
    %c0_i32_0 = arith.constant 0 : i32
    %c0_i32_1 = arith.constant 0 : i32
    return %c0_i32, %c0_i32_0 : i32, i32
  }
  func.func @transform_6(%arg0: i32) -> (i32, i32) {
    %c0_i32 = arith.constant 0 : i32
    %c0_i32_0 = arith.constant 0 : i32
    return %arg0, %c0_i32 : i32, i32
  }
}

</mosaic_0001>

<llo_original>
// kernel: tpu_custom_call.1
$region0: #{tpu_custom_call.1}
  #allocation0 [shape = 'u32[]', space=smem, size = 0x4, offset = 0x4, fixed_abs, tag = 'smem constant byte address 0x4 - core index']
  #allocation1 [shape = 'u32[72,128]{1,0:T(1,128)}', space=vmem, size = 0x9000, scoped, tag = 'internal scratch']
  %s0 = inlined_call_operand.vmem [shape: f32[16,1], index: 0, kind: input, shape index: {}]
  %s1 = inlined_call_operand.vmem [shape: f32[1,31], index: 1, kind: input, shape index: {}]
  %s2 = inlined_call_operand.vmem [shape: f32[1,31], index: 2, kind: input, shape index: {}]
  %s3 = inlined_call_operand.hbm [shape: f32[31,64], index: 3, kind: input, shape index: {}]
  %s4 = inlined_call_operand.vmem [shape: f32[1,64], index: 4, kind: input, shape index: {}]
  %s5 = inlined_call_operand.vmem [shape: f32[1,64], index: 5, kind: input, shape index: {}]
  %s6 = inlined_call_operand.hbm [shape: f32[16,64], index: 6, kind: output, shape index: {}]
  %s7 = sld [smem:[#allocation0]]
  $region38: #{tpu_custom_call.1} parent=0
    _
  %s9 = ssub.s32 1, %s7
  %s10 = scalar_select 0, %s9, %s7
  $region1: #{tpu_custom_call.1} parent=0
    #allocation2 [shape = 'u8[16384]{0}', space=vmem, size = 0x4000, scoped, tag = 'input window, operand 3, single buffered']
    #allocation3 [shape = 's32[1]{0}', space=sflag, size = 0x4, scoped, tag = 'scoped memory for tpu_custom_call.1']
    #allocation4 [shape = 's32[1]{0}', space=sflag, size = 0x4, scoped, tag = 'scoped memory for tpu_custom_call.1']
    #allocation5 [shape = 'u8[8192]{0}', space=vmem, size = 0x2000, scoped, tag = 'output window, operand 0, single buffered']
    %11 = vsyncpa [#allocation3], 0
    %12 = vsyncpa [#allocation4], 0
    // Predicated region
    $region2: #{tpu_custom_call.1} parent=1 // pred_check
      _
    $region3: #{tpu_custom_call.1} parent=1 // pred_check_branch
      %14 = sbr.rel (0) target = $region5
    $region4: #{tpu_custom_call.1} parent=1 // pred_region
      _
    $region5: #{tpu_custom_call.1} parent=1 // pred_fallthru
      _
    // Predicated region
    $region6: #{tpu_custom_call.1} parent=1 // pred_check
      _
    $region7: #{tpu_custom_call.1} parent=1 // pred_check_branch
      %16 = sbr.rel (0) target = $region9
    $region8: #{tpu_custom_call.1} parent=1 // pred_region
      _
    $region9: #{tpu_custom_call.1} parent=1 // pred_fallthru
      _
    // Predicated region
    $region10: #{tpu_custom_call.1} parent=1 // pred_check
      _
    $region11: #{tpu_custom_call.1} parent=1 // pred_check_branch
      %18 = sbr.rel (0) target = $region13
    $region12: #{tpu_custom_call.1} parent=1 // pred_region
      _
    $region13: #{tpu_custom_call.1} parent=1 // pred_fallthru
      _
    // Predicated region
    $region14: #{tpu_custom_call.1} parent=1 // pred_check
      _
    $region15: #{tpu_custom_call.1} parent=1 // pred_check_branch
      %20 = sbr.rel (0) target = $region17
    $region16: #{tpu_custom_call.1} parent=1 // pred_region
      %22 = vsyncadd [#allocation3], 0
      %s23 = sshll.u32 %s3, 4
      %s24 = int_to_ptr.hbm [resolvable:$true] %s23
      %s25 = sshll.u32 [#allocation2], 4
      %s26 = int_to_ptr.vmem [resolvable:$true] %s25
      %31 = dma.hbm_to_vmem [thread:$0]  %s24, 512, %s26, [#allocation3], 128, 128, 8
    $region17: #{tpu_custom_call.1} parent=1 // pred_fallthru
      _
    // Predicated region
    $region18: #{tpu_custom_call.1} parent=1 // pred_check
      _
    $region19: #{tpu_custom_call.1} parent=1 // pred_check_branch
      %33 = sbr.rel (0) target = $region21
    $region20: #{tpu_custom_call.1} parent=1 // pred_region
      _
    $region21: #{tpu_custom_call.1} parent=1 // pred_fallthru
      _
    // Predicated region
    $region22: #{tpu_custom_call.1} parent=1 // pred_check
      _
    $region23: #{tpu_custom_call.1} parent=1 // pred_check_branch
      %35 = sbr.rel (0) target = $region25
    $region24: #{tpu_custom_call.1} parent=1 // pred_region
      _
    $region25: #{tpu_custom_call.1} parent=1 // pred_fallthru
      _
    // Predicated region
    $region26: #{tpu_custom_call.1} parent=1 // pred_check
      _
    $region27: #{tpu_custom_call.1} parent=1 // pred_check_branch
      %37 = sbr.rel (0) target = $region29
    $region28: #{tpu_custom_call.1} parent=1 // pred_region
      %39 = dma.done [#allocation3], 512
    $region29: #{tpu_custom_call.1} parent=1 // pred_fallthru
      _
    %v40 = vld [vmem:[%s0] sm:$0xff]
    %v41 = vld [vmem:[%s0 + $0x8] sm:$0xff]
    %v42 = vld [vmem:[%s1] sm:$0x1]
    %44 = vset.pattern.permute.xlu0 0
    %45 = vperm.xlu0 %44, %v40
    %v46 = vpop.permute.xlu0 %45
    %49 = vset.pattern.permute.xlu0 0
    %50 = vperm.xlu0 %49, %v41
    %v51 = vpop.permute.xlu0 %50
    %v54 = vperm.slane %v42, 0
    %v56 = vmul.f32 %v46, %v54
    %v57 = vmul.f32 %v51, %v54
    %v58 = vld [vmem:[%s2] sm:$0x1]
    %v60 = vperm.slane %v58, 0
    %v62 = vadd.f32 %v56, %v60
    %v63 = vadd.f32 %v57, %v60
    %v64 = vand.u32 2147483647, %v62
    %vm65 = vcmp.le.f32.partialorder %v64, 0.7853982
    %vm66 = vcmp.lt.s32.totalorder %v62, 0
    %v67 = vand.u32 %v62, 2139095040
    %v68 = vshrl.u32 %v67, 23
    %v69 = vsub.s32 %v68, 127
    %v70 = vand.u32 2147483647, %v62
    %v71 = vand.u32 %v70, 8388607
    %v72 = vor.u32 %v71, 8388608
    %v73 = vsub.s32 0, %v72
    %v74 = vadd.s32 %v69, 1
    %vm75 = vcmp.gt.s32.totalorder %v74, 0
    %v76 = vsel %vm75, %v74, 0
    %v77 = vshrl.u32 %v76, 5
    %v78 = vand.u32 %v76, 31
    %v79 = vsub.s32 32, %v78
    %v80 = vshrl.u32 683565275, %v79
    %v81 = vshll.u32 683565275, %v78
    %v82 = vshrl.u32 2475754826, %v79
    %v83 = vor.u32 %v81, %v82
    %v84 = vshll.u32 2475754826, %v78
    %v85 = vshrl.u32 2131351028, %v79
    %v86 = vor.u32 %v84, %v85
    %v87 = vshll.u32 2131351028, %v78
    %v88 = vshrl.u32 2102212464, %v79
    %v89 = vor.u32 %v87, %v88
    %v90 = vshll.u32 2102212464, %v78
    %v91 = vshrl.u32 920167782, %v79
    %v92 = vor.u32 %v90, %v91
    %v93 = vshll.u32 920167782, %v78
    %v94 = vshrl.u32 1326507024, %v79
    %v95 = vor.u32 %v93, %v94
    %vm96 = vcmp.lt.s32.totalorder %v77, 1
    %vm97 = vcmp.lt.s32.totalorder %v77, 2
    %vm98 = vcmp.lt.s32.totalorder %v77, 3
    %vm99 = vcmp.lt.s32.totalorder %v77, 4
    %v100 = vsel %vm96, %v80, %v83
    %v101 = vsel %vm99, %v89, 2102212464
    %v102 = vsel %vm98, %v86, %v101
    %v103 = vsel %vm97, %v100, %v102
    %v104 = vsel %vm96, %v83, %v86
    %v105 = vsel %vm99, %v92, 920167782
    %v106 = vsel %vm98, %v89, %v105
    %v107 = vsel %vm97, %v104, %v106
    %v108 = vsel %vm96, %v86, %v89
    %v109 = vsel %vm99, %v95, 1326507024
    %v110 = vsel %vm98, %v92, %v109
    %v111 = vsel %vm97, %v108, %v110
    %v112 = vshll.u32 %v72, 8
    %v113 = vand.u32 %v112, 65535
    %v114 = vshrl.u32 %v112, 16
    %v115 = vand.u32 %v111, 65535
    %v116 = vshrl.u32 %v111, 16
    %v117 = vmul.u32 %v113, %v115
    %v118 = vmul.u32 %v113, %v116
    %v119 = vmul.u32 %v114, %v115
    %v120 = vmul.u32 %v114, %v116
    %v121 = vshll.u32 %v118, 16
    %v122 = vshrl.u32 %v118, 16
    %v123 = vshll.u32 %v119, 16
    %v124 = vshrl.u32 %v119, 16
    %vm125 = vc.u32 %v117, %v121
    %v126 = vsel %vm125, 1, 0
    %v127 = vadd.s32 %v117, %v121
    %v128 = vadd.s32 %v120, %v126
    %vm129 = vc.u32 %v127, %v123
    %v130 = vsel %vm129, 1, 0
    %v131 = vadd.s32 %v127, %v123
    %v132 = vadd.s32 %v128, %v130
    %v133 = vadd.s32 %v132, %v122
    %v134 = vadd.s32 %v133, %v124
    %v135 = vand.u32 %v112, 65535
    %v136 = vshrl.u32 %v112, 16
    %v137 = vand.u32 %v107, 65535
    %v138 = vshrl.u32 %v107, 16
    %v139 = vmul.u32 %v135, %v137
    %v140 = vmul.u32 %v135, %v138
    %v141 = vmul.u32 %v136, %v137
    %v142 = vmul.u32 %v136, %v138
    %v143 = vshll.u32 %v140, 16
    %v144 = vshrl.u32 %v140, 16
    %v145 = vshll.u32 %v141, 16
    %v146 = vshrl.u32 %v141, 16
    %vm147 = vc.u32 %v139, %v143
    %v148 = vsel %vm147, 1, 0
    %v149 = vadd.s32 %v139, %v143
    %v150 = vadd.s32 %v142, %v148
    %vm151 = vc.u32 %v149, %v145
    %v152 = vsel %vm151, 1, 0
    %v153 = vadd.s32 %v149, %v145
    %v154 = vadd.s32 %v150, %v152
    %v155 = vadd.s32 %v154, %v144
    %v156 = vadd.s32 %v155, %v146
    %v157 = vmul.u32 %v112, %v103
    %v158 = vadd.s32 %v134, %v153
    %vm159 = vc.u32 %v134, %v153
    %v160 = vadd.s32 %v156, 1
    %v161 = vsel %vm159, %v160, %v156
    %v162 = vadd.s32 %v157, %v161
    %v163 = vadd.s32 %v162, 536870912
    %v164 = vshrl.u32 %v163, 30
    %v165 = vshll.u32 %v164, 30
    %v166 = vsub.s32 %v162, %v165
    %vm167 = vcmp.lt.s32.totalorder %v166, 0
    %v168 = vsub.s32 0, %v166
    %v169 = vsel %vm167, %v168, %v166
    %v170 = vclz %v169
    %v171 = vsub.s32 %v170, 2
    %vm172 = vcmp.gt.s32.totalorder 0, %v171
    %v173 = vsel %vm172, 0, %v171
    %v174 = vsub.s32 32, %v173
    %v175 = vshll.u32 %v166, %v173
    %v176 = vshrl.u32 %v158, %v174
    %v177 = vor.u32 %v175, %v176
    %v178 = vsub.s32 4294967266, %v173
    %v179 = vadd.s32 %v178, 127
    %v180 = vshll.u32 %v179, 23
    %v181 = vor.u32 4788187, %v180
    %v182 = vand.u32 2147483647, %v181
    %v184 = vcvt.s32.f32 %v177
    %v185 = vmul.f32 %v184, %v182
    %v186 = vxor.u32 %v185, 2147483648
    %v187 = vsel %vm66, %v186, %v185
    %v188 = vsub.s32 4, %v164
    %v189 = vsel %vm66, %v188, %v164
    %v190 = vsel %vm65, %v62, %v187
    %v191 = vsel %vm65, 0, %v189
    %v192 = vmul.f32 %v190, %v190
    %v193 = vmul.f32 %v192, -0.001358992
    %v194 = vadd.f32 %v193, 0.041655596
    %v195 = vmul.f32 %v192, %v194
    %v196 = vadd.f32 %v195, -0.4999988
    %v197 = vmul.f32 %v192, %v196
    %v198 = vadd.f32 1.0, %v197
    %v199 = vmul.f32 %v190, %v190
    %v200 = vmul.f32 %v199, -0.00019511016
    %v201 = vadd.f32 %v200, 0.008332121
    %v202 = vmul.f32 %v199, %v201
    %v203 = vadd.f32 %v202, -0.16666654
    %v204 = vmul.f32 %v199, %v203
    %v205 = vadd.f32 %v204, 1.0
    %v206 = vmul.f32 %v205, %v190
    %vm207 = vweird.f32 %v62
    %v208 = vadd.s32 %v191, 3
    %v209 = vand.u32 %v208, 3
    %vm210 = vcmp.lt.s32.totalorder %v209, 2
    %vm211 = vcmp.eq.s32.totalorder %v209, 0
    %v212 = vxor.u32 %v206, 2147483648
    %v213 = vsel %vm211, %v198, %v212
    %vm214 = vcmp.eq.s32.totalorder %v209, 2
    %v215 = vxor.u32 %v198, 2147483648
    %v216 = vsel %vm214, %v215, %v206
    %v217 = vsel %vm210, %v213, %v216
    %v218 = vsel %vm207, nan, %v217
    %v219 = vand.u32 2147483647, %v63
    %vm220 = vcmp.le.f32.partialorder %v219, 0.7853982
    %vm221 = vcmp.lt.s32.totalorder %v63, 0
    %v222 = vand.u32 %v63, 2139095040
    %v223 = vshrl.u32 %v222, 23
    %v224 = vsub.s32 %v223, 127
    %v225 = vand.u32 2147483647, %v63
    %v226 = vand.u32 %v225, 8388607
    %v227 = vor.u32 %v226, 8388608
    %v228 = vsub.s32 0, %v227
    %v229 = vadd.s32 %v224, 1
    %vm230 = vcmp.gt.s32.totalorder %v229, 0
    %v231 = vsel %vm230, %v229, 0
    %v232 = vshrl.u32 %v231, 5
    %v233 = vand.u32 %v231, 31
    %v234 = vsub.s32 32, %v233
    %v235 = vshrl.u32 683565275, %v234
    %v236 = vshll.u32 683565275, %v233
    %v237 = vshrl.u32 2475754826, %v234
    %v238 = vor.u32 %v236, %v237
    %v239 = vshll.u32 2475754826, %v233
    %v240 = vshrl.u32 2131351028, %v234
    %v241 = vor.u32 %v239, %v240
    %v242 = vshll.u32 2131351028, %v233
    %v243 = vshrl.u32 2102212464, %v234
    %v244 = vor.u32 %v242, %v243
    %v245 = vshll.u32 2102212464, %v233
    %v246 = vshrl.u32 920167782, %v234
    %v247 = vor.u32 %v245, %v246
    %v248 = vshll.u32 920167782, %v233
    %v249 = vshrl.u32 1326507024, %v234
    %v250 = vor.u32 %v248, %v249
    %vm251 = vcmp.lt.s32.totalorder %v232, 1
    %vm252 = vcmp.lt.s32.totalorder %v232, 2
    %vm253 = vcmp.lt.s32.totalorder %v232, 3
    %vm254 = vcmp.lt.s32.totalorder %v232, 4
    %v255 = vsel %vm251, %v235, %v238
    %v256 = vsel %vm254, %v244, 2102212464
    %v257 = vsel %vm253, %v241, %v256
    %v258 = vsel %vm252, %v255, %v257
    %v259 = vsel %vm251, %v238, %v241
    %v260 = vsel %vm254, %v247, 920167782
    %v261 = vsel %vm253, %v244, %v260
    %v262 = vsel %vm252, %v259, %v261
    %v263 = vsel %vm251, %v241, %v244
    %v264 = vsel %vm254, %v250, 1326507024
    %v265 = vsel %vm253, %v247, %v264
    %v266 = vsel %vm252, %v263, %v265
    %v267 = vshll.u32 %v227, 8
    %v268 = vand.u32 %v267, 65535
    %v269 = vshrl.u32 %v267, 16
    %v270 = vand.u32 %v266, 65535
    %v271 = vshrl.u32 %v266, 16
    %v272 = vmul.u32 %v268, %v270
    %v273 = vmul.u32 %v268, %v271
    %v274 = vmul.u32 %v269, %v270
    %v275 = vmul.u32 %v269, %v271
    %v276 = vshll.u32 %v273, 16
    %v277 = vshrl.u32 %v273, 16
    %v278 = vshll.u32 %v274, 16
    %v279 = vshrl.u32 %v274, 16
    %vm280 = vc.u32 %v272, %v276
    %v281 = vsel %vm280, 1, 0
    %v282 = vadd.s32 %v272, %v276
    %v283 = vadd.s32 %v275, %v281
    %vm284 = vc.u32 %v282, %v278
    %v285 = vsel %vm284, 1, 0
    %v286 = vadd.s32 %v282, %v278
    %v287 = vadd.s32 %v283, %v285
    %v288 = vadd.s32 %v287, %v277
    %v289 = vadd.s32 %v288, %v279
    %v290 = vand.u32 %v267, 65535
    %v291 = vshrl.u32 %v267, 16
    %v292 = vand.u32 %v262, 65535
    %v293 = vshrl.u32 %v262, 16
    %v294 = vmul.u32 %v290, %v292
    %v295 = vmul.u32 %v290, %v293
    %v296 = vmul.u32 %v291, %v292
    %v297 = vmul.u32 %v291, %v293
    %v298 = vshll.u32 %v295, 16
    %v299 = vshrl.u32 %v295, 16
    %v300 = vshll.u32 %v296, 16
    %v301 = vshrl.u32 %v296, 16
    %vm302 = vc.u32 %v294, %v298
    %v303 = vsel %vm302, 1, 0
    %v304 = vadd.s32 %v294, %v298
    %v305 = vadd.s32 %v297, %v303
    %vm306 = vc.u32 %v304, %v300
    %v307 = vsel %vm306, 1, 0
    %v308 = vadd.s32 %v304, %v300
    %v309 = vadd.s32 %v305, %v307
    %v310 = vadd.s32 %v309, %v299
    %v311 = vadd.s32 %v310, %v301
    %v312 = vmul.u32 %v267, %v258
    %v313 = vadd.s32 %v289, %v308
    %vm314 = vc.u32 %v289, %v308
    %v315 = vadd.s32 %v311, 1
    %v316 = vsel %vm314, %v315, %v311
    %v317 = vadd.s32 %v312, %v316
    %v318 = vadd.s32 %v317, 536870912
    %v319 = vshrl.u32 %v318, 30
    %v320 = vshll.u32 %v319, 30
    %v321 = vsub.s32 %v317, %v320
    %vm322 = vcmp.lt.s32.totalorder %v321, 0
    %v323 = vsub.s32 0, %v321
    %v324 = vsel %vm322, %v323, %v321
    %v325 = vclz %v324
    %v326 = vsub.s32 %v325, 2
    %vm327 = vcmp.gt.s32.totalorder 0, %v326
    %v328 = vsel %vm327, 0, %v326
    %v329 = vsub.s32 32, %v328
    %v330 = vshll.u32 %v321, %v328
    %v331 = vshrl.u32 %v313, %v329
    %v332 = vor.u32 %v330, %v331
    %v333 = vsub.s32 4294967266, %v328
    %v334 = vadd.s32 %v333, 127
    %v335 = vshll.u32 %v334, 23
    %v336 = vor.u32 4788187, %v335
    %v337 = vand.u32 2147483647, %v336
    %v339 = vcvt.s32.f32 %v332
    %v340 = vmul.f32 %v339, %v337
    %v341 = vxor.u32 %v340, 2147483648
    %v342 = vsel %vm221, %v341, %v340
    %v343 = vsub.s32 4, %v319
    %v344 = vsel %vm221, %v343, %v319
    %v345 = vsel %vm220, %v63, %v342
    %v346 = vsel %vm220, 0, %v344
    %v347 = vmul.f32 %v345, %v345
    %v348 = vmul.f32 %v347, -0.001358992
    %v349 = vadd.f32 %v348, 0.041655596
    %v350 = vmul.f32 %v347, %v349
    %v351 = vadd.f32 %v350, -0.4999988
    %v352 = vmul.f32 %v347, %v351
    %v353 = vadd.f32 1.0, %v352
    %v354 = vmul.f32 %v345, %v345
    %v355 = vmul.f32 %v354, -0.00019511016
    %v356 = vadd.f32 %v355, 0.008332121
    %v357 = vmul.f32 %v354, %v356
    %v358 = vadd.f32 %v357, -0.16666654
    %v359 = vmul.f32 %v354, %v358
    %v360 = vadd.f32 %v359, 1.0
    %v361 = vmul.f32 %v360, %v345
    %vm362 = vweird.f32 %v63
    %v363 = vadd.s32 %v346, 3
    %v364 = vand.u32 %v363, 3
    %vm365 = vcmp.lt.s32.totalorder %v364, 2
    %vm366 = vcmp.eq.s32.totalorder %v364, 0
    %v367 = vxor.u32 %v361, 2147483648
    %v368 = vsel %vm366, %v353, %v367
    %vm369 = vcmp.eq.s32.totalorder %v364, 2
    %v370 = vxor.u32 %v353, 2147483648
    %v371 = vsel %vm369, %v370, %v361
    %v372 = vsel %vm365, %v368, %v371
    %v373 = vsel %vm362, nan, %v372
    %v374 = vld [vmem:[#allocation2] sm:$0xff]
    %v375 = vld [vmem:[#allocation2 + $0x8] sm:$0xff]
    %v376 = vld [vmem:[#allocation2 + $0x10] sm:$0xff]
    %v377 = vld [vmem:[#allocation2 + $0x18] sm:$0x7f]
    %v378 = vld [vmem:[%s4] sm:$0x1]
    %v380 = vperm.slane %v378, 0
    %v382 = vmul.f32 %v46, %v380
    %v383 = vmul.f32 %v51, %v380
    %vm384 = vcmask 252928
    %v386 = vsel %vm384, %v218, 0
    %v389 = vsel %vm384, %v373, 0
    %vm391 = vcmask 1046528
    %v393 = vsel %vm391, %v377, 0
    %395 = vmatpush.msra.mxu0 0.0
    %396 = vmatpush.msra.mxu0 0.0
    %397 = vmatpush.msra.mxu0 0.0
    %398 = vmatpush.msra.mxu0 0.0
    %399 = vmatpush.msra.mxu0 0.0
    %400 = vmatpush.msra.mxu0 0.0
    %401 = vmatpush.msra.mxu0 0.0
    %402 = vmatpush.msra.mxu0 0.0
    %403 = vmatpush.msra.mxu0 0.0
    %404 = vmatpush.msra.mxu0 0.0
    %405 = vmatpush.msra.mxu0 0.0
    %406 = vmatpush.msra.mxu0 0.0
    %407 = vmatpush.msra.mxu0 %v393
    %408 = vmatpush.msra.mxu0 %v376
    %409 = vmatpush.msra.mxu0 %v375
    %410 = vmatpush.msra.mxu0 %v374
    %411 = vmatmul.f32.gmra.mxu0 %v386
    %v412 = vpop.f32.mrf.mxu0
    %v413 = vadd.f32 %v382, %v412
    %414 = vmatmul.f32.gmra.mxu0 %v389
    %v415 = vpop.f32.mrf.mxu0
    %v416 = vadd.f32 %v383, %v415
    %417 = vdwg.mxu0
    %v418 = vld [vmem:[%s5] sm:$0x1]
    %v420 = vperm.slane %v418, 0
    %v422 = vadd.f32 %v413, %v420
    %v423 = vadd.f32 %v416, %v420
    %v424 = vmax.f32 %v422, 0.0
    %v425 = vmax.f32 %v423, 0.0
    %vm426 = vcmask 523264
    %427 = vst.msk [vmem:[#allocation5] sm:$0xff] %vm426, %v424
    %428 = vst.msk [vmem:[#allocation5 + $0x8] sm:$0xff] %vm426, %v425
    // Predicated region
    $region30: #{tpu_custom_call.1} parent=1 // pred_check
      _
    $region31: #{tpu_custom_call.1} parent=1 // pred_check_branch
      %430 = sbr.rel (0) target = $region33
    $region32: #{tpu_custom_call.1} parent=1 // pred_region
      %432 = vsyncadd [#allocation4], 0
      %s433 = sshll.u32 [#allocation5], 4
      %s434 = int_to_ptr.vmem [resolvable:$true] %s433
      %s435 = sshll.u32 %s6, 4
      %s436 = int_to_ptr.hbm [resolvable:$true] %s435
      %441 = dma.vmem_to_hbm [thread:$0]  %s434, 256, %s436, [#allocation4], 128, 128, 8
    $region33: #{tpu_custom_call.1} parent=1 // pred_fallthru
      _
    // Predicated region
    $region34: #{tpu_custom_call.1} parent=1 // pred_check
      _
    $region35: #{tpu_custom_call.1} parent=1 // pred_check_branch
      %443 = sbr.rel (0) target = $region37
    $region36: #{tpu_custom_call.1} parent=1 // pred_region
      %445 = dma.done [#allocation4], 256
    $region37: #{tpu_custom_call.1} parent=1 // pred_fallthru
      _
    %446 = vsyncpa [#allocation3], 1
    %447 = vsyncpa [#allocation4], 1

</llo_original>
